<compile_context>
chip_gen: v5e
topology: v5e:2x2
jax: 0.10.0
libtpu: 0.0.40
codegen_flags: <defaults>
</compile_context>

<pallas_src>
import math

import jax
import jax.numpy as jnp
from jax import lax
from jax.experimental import pallas as pl
from jax.experimental.pallas import tpu as pltpu


# ----------------------------- Pallas kernel ----------------------------------
def sentence_embedding_kernel(tok_ref, emb_ref, cs_ref, out_ref):
    # tok_ref: (TILE_ROWS, 1)   int32  flattened (batch*seq) token ids for this row tile
    # emb_ref: (V, D)           bf16   de-interleaved embedding table ([even cols | odd cols])
    # cs_ref : (TILE_ROWS, 2*D) bf16   packed RoPE slab: lanes [0:D)=[cos|cos], [D:2D)=[-sin|sin]
    # out_ref: (TILE_ROWS, D)   out_dtype
    rows = tok_ref.shape[0]
    V, D = emb_ref.shape

    # Embedding gather as a one-hot matmul on the MXU (exact: exactly one 1.0 per row).
    tok = tok_ref[...]                                                    # (rows, 1) int32
    iota_v = lax.broadcasted_iota(jnp.int32, (rows, V), 1)                # (rows, V)
    onehot = (tok == iota_v).astype(emb_ref.dtype)                        # (rows, V) bf16
    x = jnp.dot(onehot, emb_ref[...], preferred_element_type=jnp.float32)  # (rows, D) f32
    # TODO(synk): for a real vocab (V >~ 1-2K) replace the one-hot matmul with a
    # scalar-prefetched row gather and leave the table in HBM.

    # RoPE factors: one lane-dense slab, sliced at tile-aligned lane offsets, upcast to f32.
    c2 = cs_ref[:, :D].astype(jnp.float32)                                # [cos | cos]
    s2 = cs_ref[:, D:].astype(jnp.float32)                                # [-sin | sin]

    # Half-split RoPE with no concatenate: x = [xe | xo]; roll by D/2 gives [xo | xe];
    #   [xe|xo]*[cos|cos] + [xo|xe]*[-sin|sin] = [xe*cos - xo*sin | xo*cos + xe*sin]
    x_swap = pltpu.roll(x, shift=D // 2, axis=1)                          # XLU slot, off the VPU path
    out_ref[...] = (x * c2 + x_swap * s2).astype(out_ref.dtype)

    # TODO(synk): nn.Dropout(p=0.2) is identity in eval mode; stochastic training dropout
    # (pltpu.prng_seed + mask) is not reproduced.


# ----------------------------- one-time preparation -----------------------------
def prepare_embedding_table(emb_table, dtype=jnp.bfloat16):
    """One-time weight prep (hoisted out of the forward): de-interleave the columns so the
    kernel only needs contiguous half-slices, and downcast to bf16 (halves HBM/VMEM traffic;
    the gather itself stays exact, accumulation is f32)."""
    return jnp.concatenate([emb_table[:, 0::2], emb_table[:, 1::2]], axis=-1).astype(dtype)


def rope_tables(d_model, max_seq_len):
    theta = 10000.0 ** (-jnp.arange(0, d_model, 2, dtype=jnp.float32) / d_model)  # [D//2]
    pos = jnp.arange(max_seq_len, dtype=jnp.float32)[:, None]                     # [S, 1]
    angles = pos * theta                                                          # [S, D//2]
    return jnp.cos(angles), jnp.sin(angles)


def prepare_rope_slab(cos, sin, seqs, dtype=jnp.bfloat16):
    """One-time (per S, D, seqs) prep: pack the per-row RoPE factors into a single lane-dense
    [seqs*S, 2*D] slab = [[cos|cos] , [-sin|sin]] repeated per sequence in the tile (one DMA,
    constant index_map in the kernel)."""
    c2 = jnp.concatenate([cos, cos], axis=-1)          # [S, D]
    s2 = jnp.concatenate([-sin, sin], axis=-1)         # [S, D]
    slab = jnp.concatenate([c2, s2], axis=-1)          # [S, 2D]
    return jnp.tile(slab, (seqs, 1)).astype(dtype)     # [seqs*S, 2D]


def plan_tiles(B, S, *, target_tile_rows=2048, min_grid_steps=2):
    """Pick whole-sequences-per-tile (seqs) and the grid size.

    - tile_rows = seqs*S is kept a multiple of 8 (sublane alignment).
    - tiles approach target_tile_rows (~2K rows) to amortize per-grid-step overhead.
    - >= min_grid_steps grid steps when the batch allows it (v7x: feed both TensorCores).
    - prefer seqs that divides B (no token padding, no garbage-row writeback), and an even
      number of grid steps when possible (v7x).
    """
    m = 8 // math.gcd(S, 8)                       # seqs granularity for 8-sublane alignment
    max_seqs = max(m, (max(1, target_tile_rows // S) // m) * m)
    b_ceil = -(-B // m) * m
    max_seqs = min(max_seqs, b_ceil)
    if min_grid_steps > 1 and b_ceil >= min_grid_steps * m:
        max_seqs = min(max_seqs, max(m, ((b_ceil // min_grid_steps) // m) * m))

    seqs = None
    for want_even in (True, False):               # prefer no-padding AND an even grid
        s = max_seqs
        while s >= m:
            if B % s == 0 and (not want_even or (B // s) % 2 == 0):
                seqs = s
                break
            s -= m
        if seqs is not None:
            break
    if seqs is None:
        seqs = max_seqs                            # fall back: pad the batch
    num_tiles = -(-B // seqs)
    return seqs, num_tiles


# ----------------------------- forward -----------------------------------------
def _resident_spec(block_shape, index_map):
    """Constant-index input: fetched once; single-buffer it to halve its VMEM residency.
    Falls back to the default double buffer if this jax version lacks pipeline_mode."""
    try:
        return pl.BlockSpec(block_shape, index_map, pipeline_mode=pl.Buffered(1))
    except (AttributeError, TypeError):
        return pl.BlockSpec(block_shape, index_map)


def sentence_embedding_forward(tokens_bs, emb_prepped, rope_slab, *, seqs,
                               out_dtype=jnp.float32):
    """tokens_bs: [B, S] int32; emb_prepped: [V, D] bf16 (de-interleaved);
    rope_slab: [seqs*S, 2*D] bf16 (from prepare_rope_slab) -> [B, S, D] out_dtype
    (same channel ordering as the torch module's cat([even_rot, odd_rot]))."""
    B, S = tokens_bs.shape
    V, D = emb_prepped.shape
    tile_rows = seqs * S
    assert rope_slab.shape == (tile_rows, 2 * D), "rope_slab must match (seqs*S, 2*D)"

    num_tiles = -(-B // seqs)
    B_pad = num_tiles * seqs

    tokens = tokens_bs.astype(jnp.int32)
    if B_pad != B:                                   # ragged tail: pad with id 0 (<pad>)
        tokens = jnp.concatenate([tokens, jnp.zeros((B_pad - B, S), jnp.int32)], axis=0)
    # Clamp out-of-vocab ids (nn.Embedding would raise; the one-hot would silently zero them).
    tok_flat = jnp.clip(tokens.reshape(B_pad * S, 1), 0, V - 1)

    # VMEM budget: token + output blocks are double-buffered, constant inputs single-buffered.
    # The (rows, 1) int32 token block lane-pads to 128, so count it at full padded size.
    out_el = jnp.dtype(out_dtype).itemsize
    live_bytes = (2 * tile_rows * 128 * 4                 # token blocks (lane-padded)
                  + 2 * tile_rows * D * out_el            # output blocks
                  + V * D * emb_prepped.dtype.itemsize    # bf16 table (resident)
                  + tile_rows * 2 * D * rope_slab.dtype.itemsize)  # RoPE slab (resident)
    vmem_limit = int(min(max(live_bytes + (16 << 20), 32 << 20), 100 << 20))

    out_flat = pl.pallas_call(
        sentence_embedding_kernel,
        out_shape=jax.ShapeDtypeStruct((B_pad * S, D), out_dtype),
        grid_spec=pltpu.PrefetchScalarGridSpec(
            num_scalar_prefetch=0,
            grid=(num_tiles,),
            in_specs=[
                pl.BlockSpec((tile_rows, 1), lambda t: (t, 0)),        # token ids (per tile)
                _resident_spec((V, D), lambda t: (0, 0)),              # bf16 table (constant)
                _resident_spec((tile_rows, 2 * D), lambda t: (0, 0)),  # RoPE slab (constant)
            ],
            out_specs=pl.BlockSpec((tile_rows, D), lambda t: (t, 0)),
        ),
        compiler_params=pltpu.CompilerParams(
            dimension_semantics=("parallel",),
            vmem_limit_bytes=vmem_limit,
        ),
    )(tok_flat, emb_prepped, rope_slab)

    if B_pad != B:
        out_flat = out_flat[: B * S]
    return out_flat.reshape(B, S, D)


# ----------------------------- plain-Python glue -------------------------------
def build_vocab():
    chars = list("abcdefghijklmnopqrstuvwxyz .,")
    PAD, START, END = "<pad>", "<s>", "</s>"
    vocab = [PAD, START, END] + chars
    language_to_index = {t: i for i, t in enumerate(vocab)}
    return language_to_index, START, END, PAD


def batch_tokenize(batch, language_to_index, START, END, PAD, max_seq_len,
                   start_token=True, end_token=True):
    pad_id = language_to_index[PAD]
    rows = []
    for sentence in batch:
        toks = [language_to_index.get(c, pad_id) for c in list(sentence)]
        if start_token:
            toks.insert(0, language_to_index[START])
        if end_token:
            toks.append(language_to_index[END])
        if len(toks) > max_seq_len:
            toks = toks[:max_seq_len]
        else:
            toks.extend([pad_id] * (max_seq_len - len(toks)))
        rows.append(toks)
    return jnp.asarray(rows, dtype=jnp.int32)


def reference_forward(tokens_bs, emb_prepped, cos, sin):
    """Pure-JAX reference using the same bf16 table / bf16-rounded RoPE factors and the same
    de-interleaved channel convention, so the comparison with the kernel is (near-)exact."""
    x = jnp.asarray(emb_prepped)[tokens_bs].astype(jnp.float32)   # [B, S, D], [:half]=even cols
    half = cos.shape[-1]
    cosb = cos.astype(jnp.bfloat16).astype(jnp.float32)
    sinb = sin.astype(jnp.bfloat16).astype(jnp.float32)
    xe, xo = x[..., :half], x[..., half:]
    return jnp.concatenate([xe * cosb - xo * sinb, xo * cosb + xe * sinb], axis=-1)


# ----------------------------------- main ---------------------------------------
if __name__ == "__main__":
    max_sequence_length = 16
    d_model = 128   # lane-dense feature dim (full 128-lane loads/stores)

    language_to_index, START, END, PAD = build_vocab()
    vocab_size = len(language_to_index)

    # Deterministic "nn.Embedding" weights ~ N(0, 1).
    key = jax.random.PRNGKey(0)
    emb_table = jax.random.normal(key, (vocab_size, d_model), dtype=jnp.float32)

    # One-time preparation (outside the forward pass).
    emb_prepped = prepare_embedding_table(emb_table)          # de-interleave + bf16
    cos, sin = rope_tables(d_model, max_sequence_length)

    sentences = ["hello world", "pallas tpu"]                 # batch = 2
    tokens = batch_tokenize(sentences, language_to_index, START, END, PAD,
                            max_sequence_length, start_token=True, end_token=True)

    B, S = tokens.shape
    seqs, num_tiles = plan_tiles(B, S)                        # once per (B, S)
    rope_slab = prepare_rope_slab(cos, sin, seqs)             # once per (S, d_model, seqs)

    out = sentence_embedding_forward(tokens, emb_prepped, rope_slab, seqs=seqs)
    out = jax.block_until_ready(out)

    ref = reference_forward(tokens, emb_prepped, cos, sin)
    assert out.shape == (B, max_sequence_length, d_model)
    assert jnp.allclose(out, ref, atol=1e-4, rtol=1e-4), "mismatch vs JAX reference"

    print("KERNEL_OK")
</pallas_src>

<mosaic_0001>
module attributes {stable_mosaic.version = 11 : i64} {
  func.func @sentence_embedding_kernel(%arg0: i32, %arg1: memref<16x1xi32, #tpu.memory_space<vmem>>, %arg2: memref<32x128xbf16, #tpu.memory_space<vmem>>, %arg3: memref<16x256xbf16, #tpu.memory_space<vmem>>, %arg4: memref<16x128xf32, #tpu.memory_space<vmem>>) attributes {dimension_semantics = [#tpu.dimension_semantics<parallel>], iteration_bounds = array<i64: 2>, scalar_prefetch = 0 : i64, scratch_operands = 0 : i64, tpu.core_type = #tpu.core_type<tc>, window_params = [{transform_indices = @transform_0, window_bounds = array<i64: 16, 1>}, {pipeline_mode = #tpu.pipeline_mode<synchronous>, transform_indices = @transform_1, window_bounds = array<i64: 32, 128>}, {pipeline_mode = #tpu.pipeline_mode<synchronous>, transform_indices = @transform_2, window_bounds = array<i64: 16, 256>}, {transform_indices = @transform_3, window_bounds = array<i64: 16, 128>}]} {
    %c0 = arith.constant 0 : index
    %c0_0 = arith.constant 0 : index
    %0 = vector.load %arg1[%c0, %c0_0] : memref<16x1xi32, #tpu.memory_space<vmem>>, vector<16x1xi32>
    %1 = tpu.iota {dimensions = array<i32: 1>} : vector<16x32xi32>
    %2 = vector.broadcast %0 : vector<16x1xi32> to vector<16x32xi32>
    %3 = arith.cmpi eq, %2, %1 : vector<16x32xi32>
    %4 = arith.extui %3 : vector<16x32xi1> to vector<16x32xi32>
    %5 = arith.sitofp %4 : vector<16x32xi32> to vector<16x32xf32>
    %6 = arith.truncf %5 : vector<16x32xf32> to vector<16x32xbf16>
    %c0_1 = arith.constant 0 : index
    %c0_2 = arith.constant 0 : index
    %7 = vector.load %arg2[%c0_1, %c0_2] : memref<32x128xbf16, #tpu.memory_space<vmem>>, vector<32x128xbf16>
    %cst = arith.constant dense<0.000000e+00> : vector<16x128xf32>
    %8 = tpu.matmul %6, %7, %cst {dimension_numbers = #tpu.dot_dimension_numbers<[1], [0], [0], [1], [0, 0, 1, 1], [], []>} : vector<16x32xbf16>, vector<32x128xbf16>, vector<16x128xf32> -> vector<16x128xf32>
    %c0_3 = arith.constant 0 : index
    %c0_4 = arith.constant 0 : index
    %9 = vector.load %arg3[%c0_3, %c0_4] : memref<16x256xbf16, #tpu.memory_space<vmem>>, vector<16x128xbf16>
    %10 = arith.extf %9 : vector<16x128xbf16> to vector<16x128xf32>
    %c0_5 = arith.constant 0 : index
    %c128 = arith.constant 128 : index
    %11 = vector.load %arg3[%c0_5, %c128] : memref<16x256xbf16, #tpu.memory_space<vmem>>, vector<16x128xbf16>
    %12 = arith.extf %11 : vector<16x128xbf16> to vector<16x128xf32>
    %c64_i32 = arith.constant 64 : i32
    %13 = tpu.dynamic_rotate %8 by %c64_i32 dim 1 : vector<16x128xf32>, i32 -> vector<16x128xf32>
    %14 = arith.mulf %8, %10 : vector<16x128xf32>
    %15 = arith.mulf %13, %12 : vector<16x128xf32>
    %16 = arith.addf %14, %15 : vector<16x128xf32>
    %c0_6 = arith.constant 0 : index
    %c0_7 = arith.constant 0 : index
    %17 = vector.load %arg4[%c0_6, %c0_7] : memref<16x128xf32, #tpu.memory_space<vmem>>, vector<16x128xf32>
    tpu.vector_store %arg4[%c0_6, %c0_7], %16 {strides = array<i32>} : memref<16x128xf32, #tpu.memory_space<vmem>>, vector<16x128xf32>,
    return
  }
  func.func @transform_0(%arg0: i32) -> (i32, i32) {
    %c0_i32 = arith.constant 0 : i32
    %c0_i32_0 = arith.constant 0 : i32
    return %arg0, %c0_i32 : i32, i32
  }
  func.func @transform_1(%arg0: i32) -> (i32, i32) {
    %c0_i32 = arith.constant 0 : i32
    %c0_i32_0 = arith.constant 0 : i32
    %c0_i32_1 = arith.constant 0 : i32
    return %c0_i32, %c0_i32_0 : i32, i32
  }
  func.func @transform_2(%arg0: i32) -> (i32, i32) {
    %c0_i32 = arith.constant 0 : i32
    %c0_i32_0 = arith.constant 0 : i32
    %c0_i32_1 = arith.constant 0 : i32
    return %c0_i32, %c0_i32_0 : i32, i32
  }
  func.func @transform_3(%arg0: i32) -> (i32, i32) {
    %c0_i32 = arith.constant 0 : i32
    %c0_i32_0 = arith.constant 0 : i32
    return %arg0, %c0_i32 : i32, i32
  }
}

</mosaic_0001>

<llo_original>
// kernel: tpu_custom_call.1
$region0: #{tpu_custom_call.1}
  #allocation0 [shape = 'u32[]', space=smem, size = 0x4, offset = 0x4, fixed_abs, tag = 'smem constant byte address 0x4 - core index']
  #allocation1 [shape = 'u32[72,128]{1,0:T(1,128)}', space=vmem, size = 0x9000, scoped, tag = 'internal scratch']
  %s0 = inlined_call_operand.vmem [shape: s32[32,1], index: 0, kind: input, shape index: {}]
  %s1 = inlined_call_operand.vmem [shape: bf16[32,128], index: 1, kind: input, shape index: {}]
  %s2 = inlined_call_operand.vmem [shape: bf16[16,256], index: 2, kind: input, shape index: {}]
  %s3 = inlined_call_operand.hbm [shape: f32[32,128], index: 3, kind: output, shape index: {}]
  %s4 = sld [smem:[#allocation0]]
  $region45: #{tpu_custom_call.1} parent=0
    _
  %s6 = ssub.s32 1, %s4
  %s7 = scalar_select 0, %s6, %s4
  $region1: #{tpu_custom_call.1} parent=0
    #allocation2 [shape = 'u8[16384]{0}', space=vmem, size = 0x4000, scoped, tag = 'output window, operand 0']
    #allocation3 [shape = 's32[2]{0}', space=sflag, size = 0x8, scoped, tag = 'scoped memory for tpu_custom_call.1']
    %8 = vsyncpa [#allocation3], 0
    %s9 = scalar_lea.sflag [#allocation3], 1
    %10 = vsyncpa %s9, 0
    loop: start=0, step=1, limit=4
    $region2: #{tpu_custom_call.1} parent=1 // loop_pre_header
      _
    $region3: #{tpu_custom_call.1} parent=1 // loop_header
      %s12 = sphi 0, %s16
      %p13 = scmp.ge.s32.totalorder %s12, 4
      %s22 = sphi 0, %s24
      %s25 = sphi 0, %s22
      %s26 = sphi 0, %s25
      %s42 = sphi 0, %s26
      %s46 = sphi 0, %s46
      %s48 = sphi 0, %s46
      %s49 = sphi 0, %s48
      %s63 = sphi 0, %s49
      %s67 = sphi 0, %s67
      %s69 = sphi 0, %s67
      %s70 = sphi 0, %s69
      %s84 = sphi 0, %s70
      %s90 = sphi 0, %s92
      %s93 = sphi 0, %s90
      %s94 = sphi 0, %s93
      %s110 = sphi 0, %s94
    $region4: #{tpu_custom_call.1} parent=1 // loop_header_branch
      %15 = sbr.rel (%p13) target = $region8
    $region5: #{tpu_custom_call.1} parent=1 // loop_body
      %s17 = ssub.s32 %s12, 1
      %s18 = ssub.s32 %s12, 2
      %s19 = sadd.s32 %s12, 1
      %s20 = ssub.s32 %s12, %s19
      %p21 = scmp.eq.s32.totalorder %s20, 0
      %s23 = sadd.s32 %s22, 1
      %s24 = scalar_select %p21, %s22, %s23
      %p27 = pneg %p21
      %p28 = scmp.eq.s32.totalorder %s12, 1
      %p29 = por %p27, %p28
      %p30 = scmp.ne.s32.totalorder %s22, %s25
      %p31 = scmp.eq.s32.totalorder %s12, 0
      %p32 = por %p30, %p31
      %p33 = scmp.ne.s32.totalorder %s22, %s25
      %p34 = scmp.eq.s32.totalorder %s17, 1
      %p35 = por %p33, %p34
      %p36 = scmp.ne.s32.totalorder %s25, %s26
      %p37 = scmp.eq.s32.totalorder %s17, 0
      %p38 = por %p36, %p37
      %p39 = scmp.ne.s32.totalorder %s25, %s26
      %p40 = scmp.eq.s32.totalorder %s18, 1
      %p41 = por %p39, %p40
      %p43 = scmp.ne.s32.totalorder %s26, %s42
      %p44 = scmp.eq.s32.totalorder %s18, 0
      %p45 = por %p43, %p44
      %s47 = sadd.s32 %s46, 1
      %p50 = scmp.eq.s32.totalorder %s12, 1
      %p51 = scmp.ne.s32.totalorder %s46, %s48
      %p52 = scmp.eq.s32.totalorder %s12, 0
      %p53 = por %p51, %p52
      %p54 = scmp.ne.s32.totalorder %s46, %s48
      %p55 = scmp.eq.s32.totalorder %s17, 1
      %p56 = por %p54, %p55
      %p57 = scmp.ne.s32.totalorder %s48, %s49
      %p58 = scmp.eq.s32.totalorder %s17, 0
      %p59 = por %p57, %p58
      %p60 = scmp.ne.s32.totalorder %s48, %s49
      %p61 = scmp.eq.s32.totalorder %s18, 1
      %p62 = por %p60, %p61
      %p64 = scmp.ne.s32.totalorder %s49, %s63
      %p65 = scmp.eq.s32.totalorder %s18, 0
      %p66 = por %p64, %p65
      %s68 = sadd.s32 %s67, 1
      %p71 = scmp.eq.s32.totalorder %s12, 1
      %p72 = scmp.ne.s32.totalorder %s67, %s69
      %p73 = scmp.eq.s32.totalorder %s12, 0
      %p74 = por %p72, %p73
      %p75 = scmp.ne.s32.totalorder %s67, %s69
      %p76 = scmp.eq.s32.totalorder %s17, 1
      %p77 = por %p75, %p76
      %p78 = scmp.ne.s32.totalorder %s69, %s70
      %p79 = scmp.eq.s32.totalorder %s17, 0
      %p80 = por %p78, %p79
      %p81 = scmp.ne.s32.totalorder %s69, %s70
      %p82 = scmp.eq.s32.totalorder %s18, 1
      %p83 = por %p81, %p82
      %p85 = scmp.ne.s32.totalorder %s70, %s84
      %p86 = scmp.eq.s32.totalorder %s18, 0
      %p87 = por %p85, %p86
      %s88 = ssub.s32 %s12, %s19
      %p89 = scmp.eq.s32.totalorder %s88, 0
      %s91 = sadd.s32 %s90, 1
      %s92 = scalar_select %p89, %s90, %s91
      %p95 = pneg %p89
      %p96 = scmp.eq.s32.totalorder %s12, 1
      %p97 = por %p95, %p96
      %p98 = scmp.ne.s32.totalorder %s90, %s93
      %p99 = scmp.eq.s32.totalorder %s12, 0
      %p100 = por %p98, %p99
      %p101 = scmp.ne.s32.totalorder %s90, %s93
      %p102 = scmp.eq.s32.totalorder %s17, 1
      %p103 = por %p101, %p102
      %p104 = scmp.ne.s32.totalorder %s93, %s94
      %p105 = scmp.eq.s32.totalorder %s17, 0
      %p106 = por %p104, %p105
      %p107 = scmp.ne.s32.totalorder %s93, %s94
      %p108 = scmp.eq.s32.totalorder %s18, 1
      %p109 = por %p107, %p108
      %p111 = scmp.ne.s32.totalorder %s94, %s110
      %p112 = scmp.eq.s32.totalorder %s18, 0
      %p113 = por %p111, %p112
      %p114 = scmp.le.s32.totalorder 1, %s12
      %p115 = scmp.lt.s32.totalorder %s12, 3
      %p116 = pnand %p114, %p115
      %p117 = pneg %p116
      // Predicated region
      $region9: #{tpu_custom_call.1} parent=5 // pred_check
        _
      $region10: #{tpu_custom_call.1} parent=5 // pred_check_branch
        %119 = sbr.rel (%p116) target = $region12
      $region11: #{tpu_custom_call.1} parent=5 // pred_region
        %s120 = ssub.s32 %s12, 1
        // Predicated region
        $region13: #{tpu_custom_call.1} parent=11 // pred_check
          %p121 = pneg %p59
        $region14: #{tpu_custom_call.1} parent=11 // pred_check_branch
          %123 = sbr.rel (%p121) target = $region16
        $region15: #{tpu_custom_call.1} parent=11 // pred_region
          _
        $region16: #{tpu_custom_call.1} parent=11 // pred_fallthru
          _
        // Predicated region
        $region17: #{tpu_custom_call.1} parent=11 // pred_check
          %p124 = pneg %p80
        $region18: #{tpu_custom_call.1} parent=11 // pred_check_branch
          %126 = sbr.rel (%p124) target = $region20
        $region19: #{tpu_custom_call.1} parent=11 // pred_region
          _
        $region20: #{tpu_custom_call.1} parent=11 // pred_fallthru
          _
      $region12: #{tpu_custom_call.1} parent=5 // pred_fallthru
        _
      %p127 = scmp.lt.s32.totalorder %s12, 2
      // Predicated region
      $region21: #{tpu_custom_call.1} parent=5 // pred_check
        %p128 = pneg %p127
      $region22: #{tpu_custom_call.1} parent=5 // pred_check_branch
        %130 = sbr.rel (%p128) target = $region24
      $region23: #{tpu_custom_call.1} parent=5 // pred_region
        // Predicated region
        $region25: #{tpu_custom_call.1} parent=23 // pred_check
          %p131 = pneg %p32
        $region26: #{tpu_custom_call.1} parent=23 // pred_check_branch
          %133 = sbr.rel (%p131) target = $region28
        $region27: #{tpu_custom_call.1} parent=23 // pred_region
          %s134 = smul.u32 2, %s12
          %p135 = scmp.lt.s32.totalorder %s134, 3
          %s136 = scalar_select %p135, %s134, 3
          %s137 = smul.addr %s136, 8
          %s138 = scalar_lea.vmem %s0, %s137
          %s139 = smul.u32 2, %s12
        $region28: #{tpu_custom_call.1} parent=23 // pred_fallthru
          _
      $region24: #{tpu_custom_call.1} parent=5 // pred_fallthru
        _
      %p140 = scmp.le.s32.totalorder 1, %s12
      %p141 = scmp.lt.s32.totalorder %s12, 3
      %p142 = pnand %p140, %p141
      %p143 = pneg %p142
      // Predicated region
      $region29: #{tpu_custom_call.1} parent=5 // pred_check
        _
      $region30: #{tpu_custom_call.1} parent=5 // pred_check_branch
        %145 = sbr.rel (%p142) target = $region32
      $region31: #{tpu_custom_call.1} parent=5 // pred_region
        %s146 = ssub.s32 %s12, 1
        %s147 = smul.u32 2, %s17
        %p148 = scmp.lt.s32.totalorder %s147, 3
        %s149 = scalar_select %p148, %s147, 3
        %s150 = smul.addr %s149, 8
        %s151 = scalar_lea.vmem %s0, %s150
        %p152 = pneg %p38
        %p153 = pneg %p35
        %p154 = pneg %p59
        %p155 = pneg %p56
        %p156 = pneg %p80
        %p157 = pneg %p77
        %p158 = pneg %p106
        %p159 = pneg %p103
        %s160 = sand.u32 %s93, 1
        %s161 = scalar_lea.sflag [#allocation3], %s160
        %s162 = sand.u32 %s93, 1
        %s163 = smul.addr %s162, 16
        %s164 = scalar_lea.vmem [#allocation2], %s163
        %s165 = smul.u32 2, %s17
        %p166 = scmp.lt.s32.totalorder %s165, 3
        %s167 = scalar_select %p166, %s165, 3
        %s168 = smul.addr %s167, 8
        %s169 = scalar_lea.vmem %s0, %s168
        %s170 = smul.u32 2, %s17
        %s171 = smul.u32 2, %s17
        %v173 = vld [vmem:[%s169] sm:$0xff]
        %v174 = vld [vmem:[%s169 + $0x8] sm:$0xff]
        %v175 = vlaneseq
        %v176 = vand.u32 %v175, 127
        %177 = vset.pattern.permute.xlu0 0
        %178 = vperm.xlu0 %177, %v173
        %v179 = vpop.permute.xlu0 %178
        %180 = vset.pattern.permute.xlu0 0
        %181 = vperm.xlu0 %180, %v174
        %v182 = vpop.permute.xlu0 %181
        %vm183 = vcmp.eq.s32.totalorder %v179, %v176
        %vm184 = vcmp.eq.s32.totalorder %v182, %v176
        %v185 = vsel %vm183, 1, 0
        %v186 = vsel %vm184, 1, 0
        %v187 = vcvt.s32.f32 %v185
        %v188 = vcvt.s32.f32 %v186
        %v189 = vpack.c.bf16 %v188, %v187
        %v190 = vld [vmem:[%s1] sm:$0xf]
        %v191 = vld [vmem:[%s1 + $0x4] sm:$0xf]
        %v192 = vld [vmem:[%s1 + $0x8] sm:$0xf]
        %v193 = vld [vmem:[%s1 + $0xc] sm:$0xf]
        %v198 = vunpack.c.l.b16 %v190
        %v199 = vunpack.c.l.b16 %v191
        %v200 = vunpack.c.l.b16 %v192
        %v201 = vunpack.c.l.b16 %v193
        %v202 = vpack.c.b16 %v199, %v198
        %v203 = vpack.c.b16 %v201, %v200
        %vm206 = vcmask 261120
        %v208 = vsel %vm206, %v189, 0
        %210 = vmatpush.bf16.msra.mxu0 0
        %211 = vmatpush.bf16.msra.mxu0 0
        %212 = vmatpush.bf16.msra.mxu0 0
        %213 = vmatpush.bf16.msra.mxu0 0
        %214 = vmatpush.bf16.msra.mxu0 0
        %215 = vmatpush.bf16.msra.mxu0 0
        %216 = vmatpush.bf16.msra.mxu0 %v203
        %217 = vmatpush.bf16.msra.mxu0 %v202
        %218 = vmatmul.bf16.gmra.mxu0 %v208
        %v219 = vpop.f32.mrf.mxu0
        %v220 = vadd.f32 0.0, %v219
        %v221 = vpop.f32.mrf.mxu0
        %v222 = vadd.f32 0.0, %v221
        %223 = vdwg.mxu0
        %v224 = vld [vmem:[%s2] sm:$0xf]
        %v225 = vld [vmem:[%s2 + $0x8] sm:$0xf]
        %v226 = vunpack.c.l.bf16 %v224
        %v227 = vunpack.c.l.bf16 %v225
        %v228 = vld [vmem:[%s2 + $0x4] sm:$0xf]
        %v229 = vld [vmem:[%s2 + $0xc] sm:$0xf]
        %v230 = vunpack.c.l.bf16 %v228
        %v231 = vunpack.c.l.bf16 %v229
        %232 = vrot.lane.b32.xlu0 %v220, 64
        %v233 = vpop.permute.xlu0 %232
        %234 = vrot.lane.b32.xlu0 %v222, 64
        %v235 = vpop.permute.xlu0 %234
        %v236 = vmul.f32 %v220, %v226
        %v237 = vmul.f32 %v222, %v227
        %v238 = vmul.f32 %v233, %v230
        %v239 = vmul.f32 %v235, %v231
        %v240 = vadd.f32 %v236, %v238
        %v241 = vadd.f32 %v237, %v239
        %242 = vst [vmem:[%s164] sm:$0xff] %v240
        %243 = vst [vmem:[%s164 + $0x8] sm:$0xff] %v241
        %s244 = sand.u32 %s93, 1
        %s245 = scalar_lea.sflag [#allocation3], %s244
        %s246 = sand.u32 %s93, 1
        %s247 = smul.addr %s246, 16
        %s248 = scalar_lea.vmem [#allocation2], %s247
        // Predicated region
        $region33: #{tpu_custom_call.1} parent=31 // pred_check
          %p249 = pneg %p103
        $region34: #{tpu_custom_call.1} parent=31 // pred_check_branch
          %251 = sbr.rel (%p249) target = $region36
        $region35: #{tpu_custom_call.1} parent=31 // pred_region
          %s252 = smul.u32 2, %s17
          %254 = vsyncadd %s245, 0
          %s255 = smul.addr %s252, 8
          %s256 = scalar_lea.hbm %s3, %s255
          %s257 = sshll.u32 %s248, 4
          %s258 = int_to_ptr.vmem [resolvable:$true] %s257
          %s259 = sshll.u32 %s256, 4
          %s260 = int_to_ptr.hbm [resolvable:$true] %s259
          %265 = dma.vmem_to_hbm [thread:$0]  %s258, 256, %s260, %s245, 128, 128, 8
        $region36: #{tpu_custom_call.1} parent=31 // pred_fallthru
          _
      $region32: #{tpu_custom_call.1} parent=5 // pred_fallthru
        _
      %p266 = scmp.le.s32.totalorder 2, %s12
      // Predicated region
      $region37: #{tpu_custom_call.1} parent=5 // pred_check
        %p267 = pneg %p266
      $region38: #{tpu_custom_call.1} parent=5 // pred_check_branch
        %269 = sbr.rel (%p267) target = $region40
      $region39: #{tpu_custom_call.1} parent=5 // pred_region
        %s270 = ssub.s32 %s12, 2
        // Predicated region
        $region41: #{tpu_custom_call.1} parent=39 // pred_check
          %p271 = pneg %p109
        $region42: #{tpu_custom_call.1} parent=39 // pred_check_branch
          %273 = sbr.rel (%p271) target = $region44
        $region43: #{tpu_custom_call.1} parent=39 // pred_region
          %s274 = sand.u32 %s94, 1
          %s275 = scalar_lea.sflag [#allocation3], %s274
          %s276 = sand.u32 %s94, 1
          %s277 = smul.addr %s276, 16
          %s278 = scalar_lea.vmem [#allocation2], %s277
          %280 = dma.done %s275, 256
        $region44: #{tpu_custom_call.1} parent=39 // pred_fallthru
          _
      $region40: #{tpu_custom_call.1} parent=5 // pred_fallthru
        _
    $region6: #{tpu_custom_call.1} parent=1 // loop_footer
      %s16 = sadd.s32 1, %s12
    $region7: #{tpu_custom_call.1} parent=1 // loop_footer_branch
      %11 = sbr.rel target = $region3
    $region8: #{tpu_custom_call.1} parent=1 // loop_exit
      _
    %281 = vsyncpa [#allocation3], 1
    %s282 = scalar_lea.sflag [#allocation3], 1
    %283 = vsyncpa %s282, 1

</llo_original>
